<compile_context>
chip_gen: v5e
topology: v5e:2x2
jax: 0.10.0
libtpu: 0.0.40
codegen_flags: <defaults>
</compile_context>

<pallas_src>
import functools

import jax
import jax.numpy as jnp
from jax.experimental import pallas as pl
from jax.experimental.pallas import tpu as pltpu

_LANE = 128
_TARGET_BLOCK_BYTES = 2 << 20          # ~2 MiB of input per block
_VMEM_LIMIT_BYTES = 48 * 1024 * 1024   # fits v5e/v6e/v7x physical VMEM with margin


def _decomp_kernel(x_ref, res_ref, mean_ref, acc_ref, *, kernel_size: int,
                   front_pad: int, end_pad: int):
    """One (L, nblk) block: sliding mean over time (sublane axis), replicate-padded.

    x_ref    : (L, nblk) input block (time on sublanes, columns on lanes)
    res_ref  : (L, nblk) residual output
    mean_ref : (L, nblk) moving-mean output
    acc_ref  : (L, nblk) float32 accumulator scratch
    """
    L = x_ref.shape[0]
    f32 = jnp.float32
    inv_k = 1.0 / kernel_size

    # Shift 0 term.
    acc_ref[...] = x_ref[...].astype(f32)

    # Forward shifts: rows t in [0, L-1-s] see x[t+s].
    for s in range(1, end_pad + 1):
        if s < L:
            acc_ref[0:L - s, :] = acc_ref[0:L - s, :] + x_ref[s:L, :].astype(f32)

    # Backward shifts: rows t in [s, L-1] see x[t-s].
    for s in range(1, front_pad + 1):
        if s < L:
            acc_ref[s:L, :] = acc_ref[s:L, :] + x_ref[0:L - s, :].astype(f32)

    # Replicate-padding boundary corrections: only the first `fr` / last `er` rows
    # receive clamped (repeated first/last timestep) contributions.
    fr = min(front_pad, L)
    if fr > 0:
        first_row = x_ref[0:1, :].astype(f32)
        for i in range(fr):
            w = float(front_pad - i)            # number of front clamps at row i
            acc_ref[i:i + 1, :] = acc_ref[i:i + 1, :] + w * first_row
    er = min(end_pad, L)
    if er > 0:
        last_row = x_ref[L - 1:L, :].astype(f32)
        for i in range(er):
            w = float(end_pad - er + 1 + i)     # number of end clamps at row L-er+i
            t = L - er + i
            acc_ref[t:t + 1, :] = acc_ref[t:t + 1, :] + w * last_row

    mean = acc_ref[...] * inv_k                 # hoisted 1/K scale, applied once
    mean_ref[...] = mean.astype(mean_ref.dtype)
    res_ref[...] = (x_ref[...].astype(f32) - mean).astype(res_ref.dtype)


def _lane_block(lane_extent: int, L: int, itemsize: int, other_steps: int) -> int:
    """Lane-tile size: multiple of 128 (or the full extent when it is smaller)."""
    if lane_extent <= _LANE:
        return lane_extent
    blk = max(_LANE,
              (_TARGET_BLOCK_BYTES // max(1, L * itemsize)) // _LANE * _LANE)
    if blk >= lane_extent:
        blk = lane_extent                       # single full-extent block (always legal)
    # Guarantee >= 2 total grid steps (pipeline overlap; v7x's 2 TensorCores).
    steps = other_steps * (-(-lane_extent // blk))
    if steps < 2 and lane_extent >= 2 * _LANE:
        blk = (-(-lane_extent // (2 * _LANE))) * _LANE
    return blk


def series_decomp(x: jax.Array, kernel_size: int):
    """JAX/Pallas equivalent of NPformer series_decomp.forward.

    x: (B, L, C).  Returns (res, moving_mean), both (B, L, C).
    """
    B, L, C = x.shape
    front_pad = kernel_size - 1 - (kernel_size - 1) // 2
    end_pad = (kernel_size - 1) // 2
    itemsize = jnp.dtype(x.dtype).itemsize

    kern = functools.partial(_decomp_kernel, kernel_size=kernel_size,
                             front_pad=front_pad, end_pad=end_pad)

    if C >= _LANE:
        # Native layout: time already on sublanes, channels on lanes -> no transposes.
        c_blk = _lane_block(C, L, itemsize, other_steps=B)
        grid = (B, -(-C // c_blk))
        res, mean = pl.pallas_call(
            kern,
            out_shape=(jax.ShapeDtypeStruct((B, L, C), x.dtype),
                       jax.ShapeDtypeStruct((B, L, C), x.dtype)),
            grid_spec=pltpu.PrefetchScalarGridSpec(
                num_scalar_prefetch=0,
                grid=grid,
                in_specs=[pl.BlockSpec((None, L, c_blk), lambda b, j: (b, 0, j))],
                out_specs=[pl.BlockSpec((None, L, c_blk), lambda b, j: (b, 0, j)),
                           pl.BlockSpec((None, L, c_blk), lambda b, j: (b, 0, j))],
                scratch_shapes=[pltpu.VMEM((L, c_blk), jnp.float32)],
            ),
            compiler_params=pltpu.CompilerParams(
                dimension_semantics=("parallel", "parallel"),
                vmem_limit_bytes=_VMEM_LIMIT_BYTES),
        )(x)
        return res, mean

    # Small C (< 128): fold batch into lanes so stores are as lane-dense as possible.
    N = B * C
    xt = jnp.transpose(x, (1, 0, 2)).reshape(L, N)
    n_blk = _lane_block(N, L, itemsize, other_steps=1)
    grid = (-(-N // n_blk),)
    res_t, mean_t = pl.pallas_call(
        kern,
        out_shape=(jax.ShapeDtypeStruct((L, N), x.dtype),
                   jax.ShapeDtypeStruct((L, N), x.dtype)),
        grid_spec=pltpu.PrefetchScalarGridSpec(
            num_scalar_prefetch=0,
            grid=grid,
            in_specs=[pl.BlockSpec((L, n_blk), lambda j: (0, j))],
            out_specs=[pl.BlockSpec((L, n_blk), lambda j: (0, j)),
                       pl.BlockSpec((L, n_blk), lambda j: (0, j))],
            scratch_shapes=[pltpu.VMEM((L, n_blk), jnp.float32)],
        ),
        compiler_params=pltpu.CompilerParams(
            dimension_semantics=("parallel",),
            vmem_limit_bytes=_VMEM_LIMIT_BYTES),
    )(xt)
    res = res_t.reshape(L, B, C).transpose(1, 0, 2)
    mean = mean_t.reshape(L, B, C).transpose(1, 0, 2)
    return res, mean


def _reference_series_decomp(x, kernel_size):
    """Pure-JAX reference mirroring the PyTorch code exactly."""
    front_pad = kernel_size - 1 - (kernel_size - 1) // 2
    end_pad = (kernel_size - 1) // 2
    front = jnp.repeat(x[:, 0:1, :], front_pad, axis=1)
    end = jnp.repeat(x[:, -1:, :], end_pad, axis=1)
    xp = jnp.concatenate([front, x, end], axis=1)
    L = x.shape[1]
    windows = jnp.stack([xp[:, k:k + L, :] for k in range(kernel_size)], axis=0)
    mean = jnp.mean(windows, axis=0)
    return x - mean, mean


if __name__ == "__main__":
    key = jax.random.PRNGKey(0)
    cases = [
        ((2, 8, 4), 5),      # small C            -> transposed (L, B*C) path
        ((1, 16, 160), 7),   # C >= 128           -> native (B, L, C) path, no transposes
        ((2, 12, 128), 25),  # kernel_size > L    -> full replicate-clamp handling
    ]
    for shape, ks in cases:
        key, sub = jax.random.split(key)
        x = jax.random.normal(sub, shape, dtype=jnp.float32)
        res, mean = jax.block_until_ready(series_decomp(x, ks))
        ref_res, ref_mean = _reference_series_decomp(x, ks)
        assert res.shape == shape and mean.shape == shape
        assert jnp.allclose(mean, ref_mean, atol=1e-5, rtol=1e-5), (shape, ks)
        assert jnp.allclose(res, ref_res, atol=1e-5, rtol=1e-5), (shape, ks)
    print("KERNEL_OK")
</pallas_src>

<mosaic_0001>
module attributes {stable_mosaic.version = 11 : i64} {
  func.func @_decomp_kernel(%arg0: i32, %arg1: memref<8x8xf32, #tpu.memory_space<vmem>>, %arg2: memref<8x8xf32, #tpu.memory_space<vmem>>, %arg3: memref<8x8xf32, #tpu.memory_space<vmem>>, %arg4: memref<8x8xf32, #tpu.memory_space<vmem>>) attributes {dimension_semantics = [#tpu.dimension_semantics<parallel>], iteration_bounds = array<i64: 1>, scalar_prefetch = 0 : i64, scratch_operands = 1 : i64, tpu.core_type = #tpu.core_type<tc>, window_params = [{transform_indices = @transform_0, window_bounds = array<i64: 8, 8>}, {transform_indices = @transform_1, window_bounds = array<i64: 8, 8>}, {transform_indices = @transform_2, window_bounds = array<i64: 8, 8>}]} {
    %c0 = arith.constant 0 : index
    %c0_0 = arith.constant 0 : index
    %0 = vector.load %arg1[%c0, %c0_0] : memref<8x8xf32, #tpu.memory_space<vmem>>, vector<8x8xf32>
    %c0_1 = arith.constant 0 : index
    %c0_2 = arith.constant 0 : index
    %1 = vector.load %arg4[%c0_1, %c0_2] : memref<8x8xf32, #tpu.memory_space<vmem>>, vector<8x8xf32>
    tpu.vector_store %arg4[%c0_1, %c0_2], %0 {strides = array<i32>} : memref<8x8xf32, #tpu.memory_space<vmem>>, vector<8x8xf32>,
    %c0_3 = arith.constant 0 : index
    %c0_4 = arith.constant 0 : index
    %2 = vector.load %arg4[%c0_3, %c0_4] : memref<8x8xf32, #tpu.memory_space<vmem>>, vector<7x8xf32>
    %c1 = arith.constant 1 : index
    %c0_5 = arith.constant 0 : index
    %3 = vector.load %arg1[%c1, %c0_5] : memref<8x8xf32, #tpu.memory_space<vmem>>, vector<7x8xf32>
    %4 = arith.addf %2, %3 : vector<7x8xf32>
    %c0_6 = arith.constant 0 : index
    %c0_7 = arith.constant 0 : index
    %5 = vector.load %arg4[%c0_6, %c0_7] : memref<8x8xf32, #tpu.memory_space<vmem>>, vector<7x8xf32>
    tpu.vector_store %arg4[%c0_6, %c0_7], %4 {strides = array<i32>} : memref<8x8xf32, #tpu.memory_space<vmem>>, vector<7x8xf32>,
    %c0_8 = arith.constant 0 : index
    %c0_9 = arith.constant 0 : index
    %6 = vector.load %arg4[%c0_8, %c0_9] : memref<8x8xf32, #tpu.memory_space<vmem>>, vector<6x8xf32>
    %c2 = arith.constant 2 : index
    %c0_10 = arith.constant 0 : index
    %7 = vector.load %arg1[%c2, %c0_10] : memref<8x8xf32, #tpu.memory_space<vmem>>, vector<6x8xf32>
    %8 = arith.addf %6, %7 : vector<6x8xf32>
    %c0_11 = arith.constant 0 : index
    %c0_12 = arith.constant 0 : index
    %9 = vector.load %arg4[%c0_11, %c0_12] : memref<8x8xf32, #tpu.memory_space<vmem>>, vector<6x8xf32>
    tpu.vector_store %arg4[%c0_11, %c0_12], %8 {strides = array<i32>} : memref<8x8xf32, #tpu.memory_space<vmem>>, vector<6x8xf32>,
    %c1_13 = arith.constant 1 : index
    %c0_14 = arith.constant 0 : index
    %10 = vector.load %arg4[%c1_13, %c0_14] : memref<8x8xf32, #tpu.memory_space<vmem>>, vector<7x8xf32>
    %c0_15 = arith.constant 0 : index
    %c0_16 = arith.constant 0 : index
    %11 = vector.load %arg1[%c0_15, %c0_16] : memref<8x8xf32, #tpu.memory_space<vmem>>, vector<7x8xf32>
    %12 = arith.addf %10, %11 : vector<7x8xf32>
    %c1_17 = arith.constant 1 : index
    %c0_18 = arith.constant 0 : index
    %13 = vector.load %arg4[%c1_17, %c0_18] : memref<8x8xf32, #tpu.memory_space<vmem>>, vector<7x8xf32>
    tpu.vector_store %arg4[%c1_17, %c0_18], %12 {strides = array<i32>} : memref<8x8xf32, #tpu.memory_space<vmem>>, vector<7x8xf32>,
    %c2_19 = arith.constant 2 : index
    %c0_20 = arith.constant 0 : index
    %14 = vector.load %arg4[%c2_19, %c0_20] : memref<8x8xf32, #tpu.memory_space<vmem>>, vector<6x8xf32>
    %c0_21 = arith.constant 0 : index
    %c0_22 = arith.constant 0 : index
    %15 = vector.load %arg1[%c0_21, %c0_22] : memref<8x8xf32, #tpu.memory_space<vmem>>, vector<6x8xf32>
    %16 = arith.addf %14, %15 : vector<6x8xf32>
    %c2_23 = arith.constant 2 : index
    %c0_24 = arith.constant 0 : index
    %17 = vector.load %arg4[%c2_23, %c0_24] : memref<8x8xf32, #tpu.memory_space<vmem>>, vector<6x8xf32>
    tpu.vector_store %arg4[%c2_23, %c0_24], %16 {strides = array<i32>} : memref<8x8xf32, #tpu.memory_space<vmem>>, vector<6x8xf32>,
    %c0_25 = arith.constant 0 : index
    %c0_26 = arith.constant 0 : index
    %18 = vector.load %arg1[%c0_25, %c0_26] : memref<8x8xf32, #tpu.memory_space<vmem>>, vector<1x8xf32>
    %c0_27 = arith.constant 0 : index
    %c0_28 = arith.constant 0 : index
    %19 = vector.load %arg4[%c0_27, %c0_28] : memref<8x8xf32, #tpu.memory_space<vmem>>, vector<1x8xf32>
    %cst = arith.constant 2.000000e+00 : f32
    %20 = vector.broadcast %cst : f32 to vector<1x8xf32>
    %21 = arith.mulf %20, %18 : vector<1x8xf32>
    %22 = arith.addf %19, %21 : vector<1x8xf32>
    %c0_29 = arith.constant 0 : index
    %c0_30 = arith.constant 0 : index
    %23 = vector.load %arg4[%c0_29, %c0_30] : memref<8x8xf32, #tpu.memory_space<vmem>>, vector<1x8xf32>
    tpu.vector_store %arg4[%c0_29, %c0_30], %22 {strides = array<i32>} : memref<8x8xf32, #tpu.memory_space<vmem>>, vector<1x8xf32>,
    %c1_31 = arith.constant 1 : index
    %c0_32 = arith.constant 0 : index
    %24 = vector.load %arg4[%c1_31, %c0_32] : memref<8x8xf32, #tpu.memory_space<vmem>>, vector<1x8xf32>
    %cst_33 = arith.constant 1.000000e+00 : f32
    %25 = vector.broadcast %cst_33 : f32 to vector<1x8xf32>
    %26 = arith.mulf %25, %18 : vector<1x8xf32>
    %27 = arith.addf %24, %26 : vector<1x8xf32>
    %c1_34 = arith.constant 1 : index
    %c0_35 = arith.constant 0 : index
    %28 = vector.load %arg4[%c1_34, %c0_35] : memref<8x8xf32, #tpu.memory_space<vmem>>, vector<1x8xf32>
    tpu.vector_store %arg4[%c1_34, %c0_35], %27 {strides = array<i32>} : memref<8x8xf32, #tpu.memory_space<vmem>>, vector<1x8xf32>,
    %c7 = arith.constant 7 : index
    %c0_36 = arith.constant 0 : index
    %29 = vector.load %arg1[%c7, %c0_36] : memref<8x8xf32, #tpu.memory_space<vmem>>, vector<1x8xf32>
    %c6 = arith.constant 6 : index
    %c0_37 = arith.constant 0 : index
    %30 = vector.load %arg4[%c6, %c0_37] : memref<8x8xf32, #tpu.memory_space<vmem>>, vector<1x8xf32>
    %cst_38 = arith.constant 1.000000e+00 : f32
    %31 = vector.broadcast %cst_38 : f32 to vector<1x8xf32>
    %32 = arith.mulf %31, %29 : vector<1x8xf32>
    %33 = arith.addf %30, %32 : vector<1x8xf32>
    %c6_39 = arith.constant 6 : index
    %c0_40 = arith.constant 0 : index
    %34 = vector.load %arg4[%c6_39, %c0_40] : memref<8x8xf32, #tpu.memory_space<vmem>>, vector<1x8xf32>
    tpu.vector_store %arg4[%c6_39, %c0_40], %33 {strides = array<i32>} : memref<8x8xf32, #tpu.memory_space<vmem>>, vector<1x8xf32>,
    %c7_41 = arith.constant 7 : index
    %c0_42 = arith.constant 0 : index
    %35 = vector.load %arg4[%c7_41, %c0_42] : memref<8x8xf32, #tpu.memory_space<vmem>>, vector<1x8xf32>
    %cst_43 = arith.constant 2.000000e+00 : f32
    %36 = vector.broadcast %cst_43 : f32 to vector<1x8xf32>
    %37 = arith.mulf %36, %29 : vector<1x8xf32>
    %38 = arith.addf %35, %37 : vector<1x8xf32>
    %c7_44 = arith.constant 7 : index
    %c0_45 = arith.constant 0 : index
    %39 = vector.load %arg4[%c7_44, %c0_45] : memref<8x8xf32, #tpu.memory_space<vmem>>, vector<1x8xf32>
    tpu.vector_store %arg4[%c7_44, %c0_45], %38 {strides = array<i32>} : memref<8x8xf32, #tpu.memory_space<vmem>>, vector<1x8xf32>,
    %c0_46 = arith.constant 0 : index
    %c0_47 = arith.constant 0 : index
    %40 = vector.load %arg4[%c0_46, %c0_47] : memref<8x8xf32, #tpu.memory_space<vmem>>, vector<8x8xf32>
    %cst_48 = arith.constant 2.000000e-01 : f32
    %41 = vector.broadcast %cst_48 : f32 to vector<8x8xf32>
    %42 = arith.mulf %40, %41 : vector<8x8xf32>
    %c0_49 = arith.constant 0 : index
    %c0_50 = arith.constant 0 : index
    %43 = vector.load %arg3[%c0_49, %c0_50] : memref<8x8xf32, #tpu.memory_space<vmem>>, vector<8x8xf32>
    tpu.vector_store %arg3[%c0_49, %c0_50], %42 {strides = array<i32>} : memref<8x8xf32, #tpu.memory_space<vmem>>, vector<8x8xf32>,
    %c0_51 = arith.constant 0 : index
    %c0_52 = arith.constant 0 : index
    %44 = vector.load %arg1[%c0_51, %c0_52] : memref<8x8xf32, #tpu.memory_space<vmem>>, vector<8x8xf32>
    %45 = arith.subf %44, %42 : vector<8x8xf32>
    %c0_53 = arith.constant 0 : index
    %c0_54 = arith.constant 0 : index
    %46 = vector.load %arg2[%c0_53, %c0_54] : memref<8x8xf32, #tpu.memory_space<vmem>>, vector<8x8xf32>
    tpu.vector_store %arg2[%c0_53, %c0_54], %45 {strides = array<i32>} : memref<8x8xf32, #tpu.memory_space<vmem>>, vector<8x8xf32>,
    return
  }
  func.func @transform_0(%arg0: i32) -> (i32, i32) {
    %c0_i32 = arith.constant 0 : i32
    %c0_i32_0 = arith.constant 0 : i32
    return %c0_i32, %arg0 : i32, i32
  }
  func.func @transform_1(%arg0: i32) -> (i32, i32) {
    %c0_i32 = arith.constant 0 : i32
    %c0_i32_0 = arith.constant 0 : i32
    return %c0_i32, %arg0 : i32, i32
  }
  func.func @transform_2(%arg0: i32) -> (i32, i32) {
    %c0_i32 = arith.constant 0 : i32
    %c0_i32_0 = arith.constant 0 : i32
    return %c0_i32, %arg0 : i32, i32
  }
}

</mosaic_0001>

<llo_original>
// kernel: tpu_custom_call.1
$region0: #{tpu_custom_call.1}
  #allocation0 [shape = 'u32[]', space=smem, size = 0x4, offset = 0x4, fixed_abs, tag = 'smem constant byte address 0x4 - core index']
  #allocation1 [shape = 'u32[72,128]{1,0:T(1,128)}', space=vmem, size = 0x9000, scoped, tag = 'internal scratch']
  #allocation2 [shape = 'f32[8,8]{1,0:T(8,128)}', space=vmem, size = 0x1000, scoped, tag = 'scratch operand']
  %s0 = inlined_call_operand.hbm [shape: f32[8,8], index: 0, kind: input, shape index: {}]
  %s1 = inlined_call_operand.hbm [shape: f32[8,8], index: 1, kind: output, shape index: {0}]
  %s2 = inlined_call_operand.hbm [shape: f32[8,8], index: 2, kind: output, shape index: {1}]
  %3 = xla_tuple %s1, %s2
  %s4 = sld [smem:[#allocation0]]
  $region26: #{tpu_custom_call.1} parent=0
    _
  %s6 = ssub.s32 1, %s4
  %s7 = scalar_select 0, %s6, %s4
  $region1: #{tpu_custom_call.1} parent=0
    #allocation3 [shape = 'u8[4096]{0}', space=vmem, size = 0x1000, scoped, tag = 'input window, operand 0, single buffered']
    #allocation4 [shape = 's32[1]{0}', space=sflag, size = 0x4, scoped, tag = 'scoped memory for tpu_custom_call.1']
    #allocation5 [shape = 's32[1]{0}', space=sflag, size = 0x4, scoped, tag = 'scoped memory for tpu_custom_call.1']
    #allocation6 [shape = 'u8[4096]{0}', space=vmem, size = 0x1000, scoped, tag = 'output window, operand 0, single buffered']
    #allocation7 [shape = 'u8[4096]{0}', space=vmem, size = 0x1000, scoped, tag = 'output window, operand 1, single buffered']
    #allocation8 [shape = 's32[1]{0}', space=sflag, size = 0x4, scoped, tag = 'scoped memory for tpu_custom_call.1']
    %8 = vsyncpa [#allocation4], 0
    %9 = vsyncpa [#allocation5], 0
    %10 = vsyncpa [#allocation8], 0
    // Predicated region
    $region2: #{tpu_custom_call.1} parent=1 // pred_check
      _
    $region3: #{tpu_custom_call.1} parent=1 // pred_check_branch
      %12 = sbr.rel (0) target = $region5
    $region4: #{tpu_custom_call.1} parent=1 // pred_region
      %14 = vsyncadd [#allocation4], 0
      %s16 = sshll.u32 %s0, 4
      %s17 = int_to_ptr.hbm [resolvable:$true] %s16
      %s18 = sshll.u32 [#allocation3], 4
      %s19 = int_to_ptr.vmem [resolvable:$true] %s18
      %21 = dma.hbm_to_vmem [thread:$0]  %s17, 128, %s19, [#allocation4]
    $region5: #{tpu_custom_call.1} parent=1 // pred_fallthru
      _
    // Predicated region
    $region6: #{tpu_custom_call.1} parent=1 // pred_check
      _
    $region7: #{tpu_custom_call.1} parent=1 // pred_check_branch
      %23 = sbr.rel (0) target = $region9
    $region8: #{tpu_custom_call.1} parent=1 // pred_region
      %25 = dma.done [#allocation4], 128
    $region9: #{tpu_custom_call.1} parent=1 // pred_fallthru
      _
    %v26 = vld [vmem:[#allocation3] sm:$0xff]
    %vm27 = vcmask 64512
    %28 = vst.msk [vmem:[#allocation2] sm:$0xff] %vm27, %v26
    %v29 = vld [vmem:[#allocation2] sm:$0x7f]
    %v30 = vld [vmem:[#allocation3 + $0x1] sm:$0x7f]
    %v31 = vadd.f32 %v29, %v30
    %vm32 = vcmask 63488
    %33 = vst.msk [vmem:[#allocation2] sm:$0x7f] %vm32, %v31
    %v34 = vld [vmem:[#allocation2] sm:$0x3f]
    %v35 = vld [vmem:[#allocation3 + $0x2] sm:$0x3f]
    %v36 = vadd.f32 %v34, %v35
    %vm37 = vcmask 62464
    %38 = vst.msk [vmem:[#allocation2] sm:$0x3f] %vm37, %v36
    %v39 = vld [vmem:[#allocation2 + $0x1] sm:$0x7f]
    %v40 = vld [vmem:[#allocation3] sm:$0x7f]
    %v41 = vadd.f32 %v39, %v40
    %42 = vst.msk [vmem:[#allocation2 + $0x1] sm:$0x7f] %vm32, %v41
    %v43 = vld [vmem:[#allocation2 + $0x2] sm:$0x3f]
    %v44 = vld [vmem:[#allocation3] sm:$0x3f]
    %v45 = vadd.f32 %v43, %v44
    %46 = vst.msk [vmem:[#allocation2 + $0x2] sm:$0x3f] %vm37, %v45
    %v47 = vld [vmem:[#allocation3] sm:$0x1]
    %v48 = vld [vmem:[#allocation2] sm:$0x1]
    %v49 = vmul.f32 %v47, 2.0
    %v50 = vadd.f32 %v48, %v49
    %vm51 = vcmask 57344
    %52 = vst.msk [vmem:[#allocation2] sm:$0x1] %vm51, %v50
    %v53 = vld [vmem:[#allocation2 + $0x1] sm:$0x1]
    %v54 = vadd.f32 %v53, %v47
    %55 = vst.msk [vmem:[#allocation2 + $0x1] sm:$0x1] %vm51, %v54
    %v56 = vld [vmem:[#allocation3 + $0x7] sm:$0x1]
    %v57 = vld [vmem:[#allocation2 + $0x6] sm:$0x1]
    %v58 = vadd.f32 %v57, %v56
    %59 = vst.msk [vmem:[#allocation2 + $0x6] sm:$0x1] %vm51, %v58
    %v60 = vld [vmem:[#allocation2 + $0x7] sm:$0x1]
    %v61 = vmul.f32 %v56, 2.0
    %v62 = vadd.f32 %v60, %v61
    %63 = vst.msk [vmem:[#allocation2 + $0x7] sm:$0x1] %vm51, %v62
    %v64 = vld [vmem:[#allocation2] sm:$0xff]
    %v65 = vmul.f32 %v64, 0.2
    %66 = vst.msk [vmem:[#allocation7] sm:$0xff] %vm27, %v65
    %v67 = vld [vmem:[#allocation3] sm:$0xff]
    %v68 = vsub.f32 %v67, %v65
    %69 = vst.msk [vmem:[#allocation6] sm:$0xff] %vm27, %v68
    // Predicated region
    $region10: #{tpu_custom_call.1} parent=1 // pred_check
      _
    $region11: #{tpu_custom_call.1} parent=1 // pred_check_branch
      %71 = sbr.rel (0) target = $region13
    $region12: #{tpu_custom_call.1} parent=1 // pred_region
      %73 = vsyncadd [#allocation5], 0
      %s75 = sshll.u32 [#allocation6], 4
      %s76 = int_to_ptr.vmem [resolvable:$true] %s75
      %s77 = sshll.u32 %s1, 4
      %s78 = int_to_ptr.hbm [resolvable:$true] %s77
      %80 = dma.vmem_to_hbm [thread:$0]  %s76, 128, %s78, [#allocation5]
    $region13: #{tpu_custom_call.1} parent=1 // pred_fallthru
      _
    // Predicated region
    $region14: #{tpu_custom_call.1} parent=1 // pred_check
      _
    $region15: #{tpu_custom_call.1} parent=1 // pred_check_branch
      %82 = sbr.rel (0) target = $region17
    $region16: #{tpu_custom_call.1} parent=1 // pred_region
      %84 = vsyncadd [#allocation8], 0
      %s86 = sshll.u32 [#allocation7], 4
      %s87 = int_to_ptr.vmem [resolvable:$true] %s86
      %s88 = sshll.u32 %s2, 4
      %s89 = int_to_ptr.hbm [resolvable:$true] %s88
      %91 = dma.vmem_to_hbm [thread:$0]  %s87, 128, %s89, [#allocation8]
    $region17: #{tpu_custom_call.1} parent=1 // pred_fallthru
      _
    // Predicated region
    $region18: #{tpu_custom_call.1} parent=1 // pred_check
      _
    $region19: #{tpu_custom_call.1} parent=1 // pred_check_branch
      %93 = sbr.rel (0) target = $region21
    $region20: #{tpu_custom_call.1} parent=1 // pred_region
      %95 = dma.done [#allocation5], 128
    $region21: #{tpu_custom_call.1} parent=1 // pred_fallthru
      _
    // Predicated region
    $region22: #{tpu_custom_call.1} parent=1 // pred_check
      _
    $region23: #{tpu_custom_call.1} parent=1 // pred_check_branch
      %97 = sbr.rel (0) target = $region25
    $region24: #{tpu_custom_call.1} parent=1 // pred_region
      %99 = dma.done [#allocation8], 128
    $region25: #{tpu_custom_call.1} parent=1 // pred_fallthru
      _
    %100 = vsyncpa [#allocation4], 1
    %101 = vsyncpa [#allocation5], 1
    %102 = vsyncpa [#allocation8], 1

</llo_original>
